<compile_context>
chip_gen: v6e
topology: v6e:2x2x1
jax: 0.10.0
libtpu: 0.0.40
codegen_flags: <defaults>
</compile_context>

<pallas_src>
import functools

import jax
import jax.numpy as jnp
from jax.experimental import pallas as pl
from jax.experimental.pallas import tpu as pltpu


def vae_kernel(x_ref, eps_ref,
               w1_ref, b1_ref,
               wh_ref, bh_ref,
               w3_ref, b3_ref,
               w4_ref, b4_ref,
               recon_ref, mulogvar_ref,
               *, latent_dim):
    x = x_ref[...]                                            # (TB, D) f32
    eps = eps_ref[...]                                        # (TB, Z) f32

    # ---- encode: h1 = relu(x @ W1 + b1)  (bf16 MXU operands, f32 accum) ----
    h1 = jnp.dot(x.astype(jnp.bfloat16), w1_ref[...],
                 preferred_element_type=jnp.float32) + b1_ref[...]
    h1 = jnp.maximum(h1, 0.0)                                 # ReLU (f32 VPU)

    # ---- fused encoder heads: [mu | logvar] = h1 @ [W21|W22] + [b21|b22] ----
    heads = jnp.dot(h1.astype(jnp.bfloat16), wh_ref[...],
                    preferred_element_type=jnp.float32) + bh_ref[...]  # (TB, 2Z)
    mu = heads[:, :latent_dim]
    logvar = heads[:, latent_dim:]

    # ---- reparameterize (training mode): z = eps * exp(0.5*logvar) + mu ----
    z = eps * jnp.exp(0.5 * logvar) + mu                      # f32 EUP/VPU

    # ---- decode ----
    h3 = jnp.dot(z.astype(jnp.bfloat16), w3_ref[...],
                 preferred_element_type=jnp.float32) + b3_ref[...]
    h3 = jnp.maximum(h3, 0.0)                                 # ReLU
    logits = jnp.dot(h3.astype(jnp.bfloat16), w4_ref[...],
                     preferred_element_type=jnp.float32) + b4_ref[...]
    # sigmoid(x) = 0.5 * tanh(0.5 * x) + 0.5: one EUP op, exact, stays in [0,1].
    recon = 0.5 * jnp.tanh(0.5 * logits) + 0.5

    recon_ref[...] = recon.astype(recon_ref.dtype)            # (TB, D) bf16, lane-dense
    mulogvar_ref[...] = heads                                 # packed (TB, 2Z) f32


def pack_params(params):
    """One-time parameter packing: fuse encoder heads, cast weights to bf16."""
    (w1, b1, w21, b21, w22, b22, w3, b3, w4, b4) = params
    w_heads = jnp.concatenate([w21, w22], axis=1)             # (H, 2Z)
    b_heads = jnp.concatenate([b21, b22], axis=1)             # (1, 2Z)
    return (w1.astype(jnp.bfloat16), b1.astype(jnp.float32),
            w_heads.astype(jnp.bfloat16), b_heads.astype(jnp.float32),
            w3.astype(jnp.bfloat16), b3.astype(jnp.float32),
            w4.astype(jnp.bfloat16), b4.astype(jnp.float32))


def _round_up(n, m):
    return ((n + m - 1) // m) * m


@functools.partial(jax.jit, static_argnames=("block_b",))
def vae_forward(x_img, eps, packed, *, block_b=1024):
    """x_img: (B, s0, s1) float32, eps: (B, Z) float32, packed: pack_params(...).

    Returns (recon[B,D] bf16, mu[B,Z] f32, logvar[B,Z] f32).
    """
    B = x_img.shape[0]
    D = x_img.shape[-2] * x_img.shape[-1]
    x = x_img.reshape(B, D).astype(jnp.float32)               # x.view(-1, s0*s1)
    eps = eps.astype(jnp.float32)

    (w1_b, b1_f, wh_b, bh_f, w3_b, b3_f, w4_b, b4_f) = packed
    H = w1_b.shape[1]
    Z = eps.shape[1]

    # Batch tile: multiple of 8 sublanes, capped at block_b, and additionally
    # capped at ~B/2 so the grid has >=2 steps whenever B allows it (v7x's two
    # TensorCores each take a share of the "parallel" axis). No wrapper pad:
    # grid = cdiv(B, TB); the tail block is padded/masked by Pallas and every
    # row is independent, so that is safe.
    B8 = _round_up(B, 8)
    TB = min(block_b, B8, max(8, _round_up(pl.cdiv(B8, 2), 8)))
    grid = (pl.cdiv(B, TB),)

    def batch_spec(ncols):
        return pl.BlockSpec((TB, ncols), lambda i: (i, 0))

    def resident(arr):
        # Full-array block, same tile every grid step -> stays VMEM-resident.
        return pl.BlockSpec(arr.shape, lambda i: (0, 0))

    # HBM-streaming cost model (advisory for XLA's scheduler).
    flops = 2 * B * (D * H + H * (2 * Z) + Z * H + H * D)
    transcendentals = B * (Z + D)                              # exp (reparam) + tanh (sigmoid)
    weight_bytes = sum(a.size * a.dtype.itemsize for a in packed)
    bytes_accessed = (B * D * 4 + B * Z * 4                    # x, eps in
                      + weight_bytes
                      + B * D * 2 + B * 2 * Z * 4)             # recon (bf16), mu||logvar out

    # Raise scoped VMEM only if needed (v5e default is 16 MiB).
    stream_bytes_per_step = TB * D * 4 + TB * Z * 4 + TB * D * 2 + TB * 2 * Z * 4
    vmem_est = 2 * stream_bytes_per_step + weight_bytes + TB * D * 8  # 2x dbl-buffer + scratch
    compiler_kwargs = dict(dimension_semantics=("parallel",))
    if vmem_est > 16 * 1024 * 1024:
        compiler_kwargs["vmem_limit_bytes"] = min(2 * vmem_est, 48 * 1024 * 1024)

    recon, mulogvar = pl.pallas_call(
        functools.partial(vae_kernel, latent_dim=Z),
        out_shape=(
            jax.ShapeDtypeStruct((B, D), jnp.bfloat16),
            jax.ShapeDtypeStruct((B, 2 * Z), jnp.float32),
        ),
        grid=grid,
        in_specs=[
            batch_spec(D),                 # x
            batch_spec(Z),                 # eps
            resident(w1_b), resident(b1_f),
            resident(wh_b), resident(bh_f),
            resident(w3_b), resident(b3_f),
            resident(w4_b), resident(b4_f),
        ],
        out_specs=(batch_spec(D), batch_spec(2 * Z)),
        compiler_params=pltpu.CompilerParams(**compiler_kwargs),
        cost_estimate=pl.CostEstimate(
            flops=flops,
            transcendentals=transcendentals,
            bytes_accessed=bytes_accessed),
    )(x, eps, w1_b, b1_f, wh_b, bh_f, w3_b, b3_f, w4_b, b4_f)

    mu = mulogvar[:, :Z]
    logvar = mulogvar[:, Z:]
    return recon, mu, logvar


def vae_reference(x, eps, params):
    """Pure-JAX f32 reference of the PyTorch forward (training mode)."""
    (w1, b1, w21, b21, w22, b22, w3, b3, w4, b4) = params
    h1 = jnp.maximum(x @ w1 + b1, 0.0)
    mu = h1 @ w21 + b21
    logvar = h1 @ w22 + b22
    z = eps * jnp.exp(0.5 * logvar) + mu
    h3 = jnp.maximum(z @ w3 + b3, 0.0)
    recon = jax.nn.sigmoid(h3 @ w4 + b4)
    return recon, mu, logvar


def init_params(key, D, H, Z):
    """Deterministic PyTorch-style Linear init: U(-1/sqrt(fan_in), 1/sqrt(fan_in))."""
    def linear(key, fan_in, fan_out):
        kw, kb = jax.random.split(key)
        bound = 1.0 / jnp.sqrt(fan_in)
        w = jax.random.uniform(kw, (fan_in, fan_out), jnp.float32, -bound, bound)
        b = jax.random.uniform(kb, (1, fan_out), jnp.float32, -bound, bound)
        return w, b

    k1, k21, k22, k3, k4 = jax.random.split(key, 5)
    w1, b1 = linear(k1, D, H)       # fc1
    w21, b21 = linear(k21, H, Z)    # fc21
    w22, b22 = linear(k22, H, Z)    # fc22
    w3, b3 = linear(k3, Z, H)       # fc3
    w4, b4 = linear(k4, H, D)       # fc4
    return (w1, b1, w21, b21, w22, b22, w3, b3, w4, b4)


if __name__ == "__main__":
    # Small shapes implied by the module's globals: s0 = s1 = 16, h = 32, z = 8.
    # B=16 gives a 2-step grid (TB=8) so the "parallel" batch axis is exercised.
    B, s0, s1, H, Z = 16, 16, 16, 32, 8
    D = s0 * s1

    key = jax.random.PRNGKey(0)
    k_x, k_eps, k_params = jax.random.split(key, 3)

    # "Image" input in [0, 1), like binarized/normalized MNIST-style data.
    x_img = jax.random.uniform(k_x, (B, s0, s1), jnp.float32)
    # eps for the reparameterization trick (torch.randn_like(std)), generated
    # in the wrapper (deterministic) and fed to the kernel.
    eps = jax.random.normal(k_eps, (B, Z), jnp.float32)

    params = init_params(k_params, D, H, Z)
    packed = pack_params(params)          # one-time packing, outside the hot path

    recon, mu, logvar = vae_forward(x_img, eps, packed)
    jax.block_until_ready((recon, mu, logvar))

    assert recon.shape == (B, D) and recon.dtype == jnp.bfloat16
    assert mu.shape == (B, Z)
    assert logvar.shape == (B, Z)
    assert bool(jnp.all(jnp.isfinite(recon.astype(jnp.float32))))
    assert bool(jnp.all(recon.astype(jnp.float32) >= 0.0))
    assert bool(jnp.all(recon.astype(jnp.float32) <= 1.0))

    # Cross-check against a pure-JAX f32 reference (loose tolerance: bf16 MXU
    # operands and bf16 recon output).
    recon_r, mu_r, logvar_r = vae_reference(x_img.reshape(B, D), eps, params)
    recon_f32 = recon.astype(jnp.float32)
    assert bool(jnp.allclose(mu, mu_r, atol=2e-2)), float(jnp.max(jnp.abs(mu - mu_r)))
    assert bool(jnp.allclose(logvar, logvar_r, atol=2e-2)), float(jnp.max(jnp.abs(logvar - logvar_r)))
    assert bool(jnp.allclose(recon_f32, recon_r, atol=5e-2)), float(jnp.max(jnp.abs(recon_f32 - recon_r)))

    print("KERNEL_OK")
</pallas_src>

<mosaic_0001>
module attributes {stable_mosaic.version = 11 : i64} {
  func.func @vae_kernel(%arg0: i32, %arg1: memref<8x256xf32, #tpu.memory_space<vmem>>, %arg2: memref<8x8xf32, #tpu.memory_space<vmem>>, %arg3: memref<256x32xbf16, #tpu.memory_space<vmem>>, %arg4: memref<1x32xf32, #tpu.memory_space<vmem>>, %arg5: memref<32x16xbf16, #tpu.memory_space<vmem>>, %arg6: memref<1x16xf32, #tpu.memory_space<vmem>>, %arg7: memref<8x32xbf16, #tpu.memory_space<vmem>>, %arg8: memref<1x32xf32, #tpu.memory_space<vmem>>, %arg9: memref<32x256xbf16, #tpu.memory_space<vmem>>, %arg10: memref<1x256xf32, #tpu.memory_space<vmem>>, %arg11: memref<8x256xbf16, #tpu.memory_space<vmem>>, %arg12: memref<8x16xf32, #tpu.memory_space<vmem>>) attributes {dimension_semantics = [#tpu.dimension_semantics<parallel>], iteration_bounds = array<i64: 2>, scalar_prefetch = 0 : i64, scratch_operands = 0 : i64, tpu.core_type = #tpu.core_type<tc>, window_params = [{transform_indices = @transform_0, window_bounds = array<i64: 8, 256>}, {transform_indices = @transform_1, window_bounds = array<i64: 8, 8>}, {pipeline_mode = #tpu.pipeline_mode<synchronous>, transform_indices = @transform_2, window_bounds = array<i64: 256, 32>}, {pipeline_mode = #tpu.pipeline_mode<synchronous>, transform_indices = @transform_3, window_bounds = array<i64: 1, 32>}, {pipeline_mode = #tpu.pipeline_mode<synchronous>, transform_indices = @transform_4, window_bounds = array<i64: 32, 16>}, {pipeline_mode = #tpu.pipeline_mode<synchronous>, transform_indices = @transform_5, window_bounds = array<i64: 1, 16>}, {pipeline_mode = #tpu.pipeline_mode<synchronous>, transform_indices = @transform_6, window_bounds = array<i64: 8, 32>}, {pipeline_mode = #tpu.pipeline_mode<synchronous>, transform_indices = @transform_7, window_bounds = array<i64: 1, 32>}, {pipeline_mode = #tpu.pipeline_mode<synchronous>, transform_indices = @transform_8, window_bounds = array<i64: 32, 256>}, {pipeline_mode = #tpu.pipeline_mode<synchronous>, transform_indices = @transform_9, window_bounds = array<i64: 1, 256>}, {transform_indices = @transform_10, window_bounds = array<i64: 8, 256>}, {transform_indices = @transform_11, window_bounds = array<i64: 8, 16>}]} {
    %c0 = arith.constant 0 : index
    %c0_0 = arith.constant 0 : index
    %0 = vector.load %arg1[%c0, %c0_0] : memref<8x256xf32, #tpu.memory_space<vmem>>, vector<8x256xf32>
    %c0_1 = arith.constant 0 : index
    %c0_2 = arith.constant 0 : index
    %1 = vector.load %arg2[%c0_1, %c0_2] : memref<8x8xf32, #tpu.memory_space<vmem>>, vector<8x8xf32>
    %2 = arith.truncf %0 : vector<8x256xf32> to vector<8x256xbf16>
    %c0_3 = arith.constant 0 : index
    %c0_4 = arith.constant 0 : index
    %3 = vector.load %arg3[%c0_3, %c0_4] : memref<256x32xbf16, #tpu.memory_space<vmem>>, vector<256x32xbf16>
    %cst = arith.constant dense<0.000000e+00> : vector<8x32xf32>
    %4 = tpu.matmul %2, %3, %cst {dimension_numbers = #tpu.dot_dimension_numbers<[1], [0], [0], [1], [0, 0, 1, 1], [], []>} : vector<8x256xbf16>, vector<256x32xbf16>, vector<8x32xf32> -> vector<8x32xf32>
    %c0_5 = arith.constant 0 : index
    %c0_6 = arith.constant 0 : index
    %5 = vector.load %arg4[%c0_5, %c0_6] : memref<1x32xf32, #tpu.memory_space<vmem>>, vector<1x32xf32>
    %6 = vector.broadcast %5 : vector<1x32xf32> to vector<8x32xf32>
    %7 = arith.addf %4, %6 : vector<8x32xf32>
    %cst_7 = arith.constant 0.000000e+00 : f32
    %8 = vector.broadcast %cst_7 : f32 to vector<8x32xf32>
    %9 = arith.maximumf %7, %8 : vector<8x32xf32>
    %10 = arith.truncf %9 : vector<8x32xf32> to vector<8x32xbf16>
    %c0_8 = arith.constant 0 : index
    %c0_9 = arith.constant 0 : index
    %11 = vector.load %arg5[%c0_8, %c0_9] : memref<32x16xbf16, #tpu.memory_space<vmem>>, vector<32x16xbf16>
    %cst_10 = arith.constant dense<0.000000e+00> : vector<8x16xf32>
    %12 = tpu.matmul %10, %11, %cst_10 {dimension_numbers = #tpu.dot_dimension_numbers<[1], [0], [0], [1], [0, 0, 1, 1], [], []>} : vector<8x32xbf16>, vector<32x16xbf16>, vector<8x16xf32> -> vector<8x16xf32>
    %c0_11 = arith.constant 0 : index
    %c0_12 = arith.constant 0 : index
    %13 = vector.load %arg6[%c0_11, %c0_12] : memref<1x16xf32, #tpu.memory_space<vmem>>, vector<1x16xf32>
    %14 = vector.broadcast %13 : vector<1x16xf32> to vector<8x16xf32>
    %15 = arith.addf %12, %14 : vector<8x16xf32>
    %16 = vector.extract_strided_slice %15 {offsets = [0, 0], sizes = [8, 8], strides = [1, 1]} : vector<8x16xf32> to vector<8x8xf32>
    %17 = vector.extract_strided_slice %15 {offsets = [0, 8], sizes = [8, 8], strides = [1, 1]} : vector<8x16xf32> to vector<8x8xf32>
    %cst_13 = arith.constant 5.000000e-01 : f32
    %18 = vector.broadcast %cst_13 : f32 to vector<8x8xf32>
    %19 = arith.mulf %18, %17 : vector<8x8xf32>
    %20 = math.exp %19 : vector<8x8xf32>
    %21 = arith.mulf %1, %20 : vector<8x8xf32>
    %22 = arith.addf %21, %16 : vector<8x8xf32>
    %23 = arith.truncf %22 : vector<8x8xf32> to vector<8x8xbf16>
    %c0_14 = arith.constant 0 : index
    %c0_15 = arith.constant 0 : index
    %24 = vector.load %arg7[%c0_14, %c0_15] : memref<8x32xbf16, #tpu.memory_space<vmem>>, vector<8x32xbf16>
    %cst_16 = arith.constant dense<0.000000e+00> : vector<8x32xf32>
    %25 = tpu.matmul %23, %24, %cst_16 {dimension_numbers = #tpu.dot_dimension_numbers<[1], [0], [0], [1], [0, 0, 1, 1], [], []>} : vector<8x8xbf16>, vector<8x32xbf16>, vector<8x32xf32> -> vector<8x32xf32>
    %c0_17 = arith.constant 0 : index
    %c0_18 = arith.constant 0 : index
    %26 = vector.load %arg8[%c0_17, %c0_18] : memref<1x32xf32, #tpu.memory_space<vmem>>, vector<1x32xf32>
    %27 = vector.broadcast %26 : vector<1x32xf32> to vector<8x32xf32>
    %28 = arith.addf %25, %27 : vector<8x32xf32>
    %cst_19 = arith.constant 0.000000e+00 : f32
    %29 = vector.broadcast %cst_19 : f32 to vector<8x32xf32>
    %30 = arith.maximumf %28, %29 : vector<8x32xf32>
    %31 = arith.truncf %30 : vector<8x32xf32> to vector<8x32xbf16>
    %c0_20 = arith.constant 0 : index
    %c0_21 = arith.constant 0 : index
    %32 = vector.load %arg9[%c0_20, %c0_21] : memref<32x256xbf16, #tpu.memory_space<vmem>>, vector<32x256xbf16>
    %cst_22 = arith.constant dense<0.000000e+00> : vector<8x256xf32>
    %33 = tpu.matmul %31, %32, %cst_22 {dimension_numbers = #tpu.dot_dimension_numbers<[1], [0], [0], [1], [0, 0, 1, 1], [], []>} : vector<8x32xbf16>, vector<32x256xbf16>, vector<8x256xf32> -> vector<8x256xf32>
    %c0_23 = arith.constant 0 : index
    %c0_24 = arith.constant 0 : index
    %34 = vector.load %arg10[%c0_23, %c0_24] : memref<1x256xf32, #tpu.memory_space<vmem>>, vector<1x256xf32>
    %35 = vector.broadcast %34 : vector<1x256xf32> to vector<8x256xf32>
    %36 = arith.addf %33, %35 : vector<8x256xf32>
    %cst_25 = arith.constant 5.000000e-01 : f32
    %37 = vector.broadcast %cst_25 : f32 to vector<8x256xf32>
    %38 = arith.mulf %37, %36 : vector<8x256xf32>
    %39 = math.tanh %38 : vector<8x256xf32>
    %cst_26 = arith.constant 5.000000e-01 : f32
    %40 = vector.broadcast %cst_26 : f32 to vector<8x256xf32>
    %41 = arith.mulf %40, %39 : vector<8x256xf32>
    %cst_27 = arith.constant 5.000000e-01 : f32
    %42 = vector.broadcast %cst_27 : f32 to vector<8x256xf32>
    %43 = arith.addf %41, %42 : vector<8x256xf32>
    %44 = arith.truncf %43 : vector<8x256xf32> to vector<8x256xbf16>
    %c0_28 = arith.constant 0 : index
    %c0_29 = arith.constant 0 : index
    %45 = vector.load %arg11[%c0_28, %c0_29] : memref<8x256xbf16, #tpu.memory_space<vmem>>, vector<8x256xbf16>
    tpu.vector_store %arg11[%c0_28, %c0_29], %44 {strides = array<i32>} : memref<8x256xbf16, #tpu.memory_space<vmem>>, vector<8x256xbf16>,
    %c0_30 = arith.constant 0 : index
    %c0_31 = arith.constant 0 : index
    %46 = vector.load %arg12[%c0_30, %c0_31] : memref<8x16xf32, #tpu.memory_space<vmem>>, vector<8x16xf32>
    tpu.vector_store %arg12[%c0_30, %c0_31], %15 {strides = array<i32>} : memref<8x16xf32, #tpu.memory_space<vmem>>, vector<8x16xf32>,
    return
  }
  func.func @transform_0(%arg0: i32) -> (i32, i32) {
    %c0_i32 = arith.constant 0 : i32
    %c0_i32_0 = arith.constant 0 : i32
    return %arg0, %c0_i32 : i32, i32
  }
  func.func @transform_1(%arg0: i32) -> (i32, i32) {
    %c0_i32 = arith.constant 0 : i32
    %c0_i32_0 = arith.constant 0 : i32
    return %arg0, %c0_i32 : i32, i32
  }
  func.func @transform_2(%arg0: i32) -> (i32, i32) {
    %c0_i32 = arith.constant 0 : i32
    %c0_i32_0 = arith.constant 0 : i32
    %c0_i32_1 = arith.constant 0 : i32
    return %c0_i32, %c0_i32_0 : i32, i32
  }
  func.func @transform_3(%arg0: i32) -> (i32, i32) {
    %c0_i32 = arith.constant 0 : i32
    %c0_i32_0 = arith.constant 0 : i32
    %c0_i32_1 = arith.constant 0 : i32
    return %c0_i32, %c0_i32_0 : i32, i32
  }
  func.func @transform_4(%arg0: i32) -> (i32, i32) {
    %c0_i32 = arith.constant 0 : i32
    %c0_i32_0 = arith.constant 0 : i32
    %c0_i32_1 = arith.constant 0 : i32
    return %c0_i32, %c0_i32_0 : i32, i32
  }
  func.func @transform_5(%arg0: i32) -> (i32, i32) {
    %c0_i32 = arith.constant 0 : i32
    %c0_i32_0 = arith.constant 0 : i32
    %c0_i32_1 = arith.constant 0 : i32
    return %c0_i32, %c0_i32_0 : i32, i32
  }
  func.func @transform_6(%arg0: i32) -> (i32, i32) {
    %c0_i32 = arith.constant 0 : i32
    %c0_i32_0 = arith.constant 0 : i32
    %c0_i32_1 = arith.constant 0 : i32
    return %c0_i32, %c0_i32_0 : i32, i32
  }
  func.func @transform_7(%arg0: i32) -> (i32, i32) {
    %c0_i32 = arith.constant 0 : i32
    %c0_i32_0 = arith.constant 0 : i32
    %c0_i32_1 = arith.constant 0 : i32
    return %c0_i32, %c0_i32_0 : i32, i32
  }
  func.func @transform_8(%arg0: i32) -> (i32, i32) {
    %c0_i32 = arith.constant 0 : i32
    %c0_i32_0 = arith.constant 0 : i32
    %c0_i32_1 = arith.constant 0 : i32
    return %c0_i32, %c0_i32_0 : i32, i32
  }
  func.func @transform_9(%arg0: i32) -> (i32, i32) {
    %c0_i32 = arith.constant 0 : i32
    %c0_i32_0 = arith.constant 0 : i32
    %c0_i32_1 = arith.constant 0 : i32
    return %c0_i32, %c0_i32_0 : i32, i32
  }
  func.func @transform_10(%arg0: i32) -> (i32, i32) {
    %c0_i32 = arith.constant 0 : i32
    %c0_i32_0 = arith.constant 0 : i32
    return %arg0, %c0_i32 : i32, i32
  }
  func.func @transform_11(%arg0: i32) -> (i32, i32) {
    %c0_i32 = arith.constant 0 : i32
    %c0_i32_0 = arith.constant 0 : i32
    return %arg0, %c0_i32 : i32, i32
  }
}

</mosaic_0001>

<llo_original>
// kernel: vae_forward.1
$region0: #{vae_forward.1}
  #allocation0 [shape = 'u32[]', space=smem, size = 0x4, offset = 0x4, fixed_abs, tag = 'smem constant byte address 0x4 - core index']
  #allocation1 [shape = 'u32[144,128]{1,0:T(1,128)}', space=vmem, size = 0x12000, scoped, tag = 'internal scratch']
  %s0 = inlined_call_operand.vmem [shape: f32[16,256], index: 0, kind: input, shape index: {}]
  %s1 = inlined_call_operand.vmem [shape: f32[16,8], index: 1, kind: input, shape index: {}]
  %s2 = inlined_call_operand.vmem [shape: bf16[256,32], index: 2, kind: input, shape index: {}]
  %s3 = inlined_call_operand.vmem [shape: f32[1,32], index: 3, kind: input, shape index: {}]
  %s4 = inlined_call_operand.vmem [shape: bf16[32,16], index: 4, kind: input, shape index: {}]
  %s5 = inlined_call_operand.vmem [shape: f32[1,16], index: 5, kind: input, shape index: {}]
  %s6 = inlined_call_operand.vmem [shape: bf16[8,32], index: 6, kind: input, shape index: {}]
  %s7 = inlined_call_operand.vmem [shape: f32[1,32], index: 7, kind: input, shape index: {}]
  %s8 = inlined_call_operand.vmem [shape: bf16[32,256], index: 8, kind: input, shape index: {}]
  %s9 = inlined_call_operand.vmem [shape: f32[1,256], index: 9, kind: input, shape index: {}]
  %s10 = inlined_call_operand.hbm [shape: bf16[16,256], index: 10, kind: output, shape index: {0}]
  %s11 = inlined_call_operand.vmem [shape: f32[16,16], index: 11, kind: output, shape index: {1}]
  %12 = xla_tuple %s10, %s11
  %s13 = sld [smem:[#allocation0]]
  $region81: #{vae_forward.1} parent=0
    _
  %s15 = ssub.s32 1, %s13
  %s16 = scalar_select 0, %s15, %s13
  $region1: #{vae_forward.1} parent=0
    #allocation2 [shape = 'u8[8192]{0}', space=vmem, size = 0x2000, scoped, tag = 'output window, operand 0']
    #allocation3 [shape = 's32[2]{0}', space=sflag, size = 0x8, scoped, tag = 'scoped memory for vae_forward.1']
    %17 = vsyncpa [#allocation3], 0
    %s18 = scalar_lea.sflag [#allocation3], 1
    %19 = vsyncpa %s18, 0
    loop: start=0, step=1, limit=4
    $region2: #{vae_forward.1} parent=1 // loop_pre_header
      _
    $region3: #{vae_forward.1} parent=1 // loop_header
      %s21 = sphi 0, %s25
      %p22 = scmp.ge.s32.totalorder %s21, 4
      %s31 = sphi 0, %s33
      %s34 = sphi 0, %s31
      %s35 = sphi 0, %s34
      %s51 = sphi 0, %s35
      %s57 = sphi 0, %s59
      %s60 = sphi 0, %s57
      %s61 = sphi 0, %s60
      %s77 = sphi 0, %s61
      %s81 = sphi 0, %s81
      %s83 = sphi 0, %s81
      %s84 = sphi 0, %s83
      %s98 = sphi 0, %s84
      %s102 = sphi 0, %s102
      %s104 = sphi 0, %s102
      %s105 = sphi 0, %s104
      %s119 = sphi 0, %s105
      %s123 = sphi 0, %s123
      %s125 = sphi 0, %s123
      %s126 = sphi 0, %s125
      %s140 = sphi 0, %s126
      %s144 = sphi 0, %s144
      %s146 = sphi 0, %s144
      %s147 = sphi 0, %s146
      %s161 = sphi 0, %s147
      %s165 = sphi 0, %s165
      %s167 = sphi 0, %s165
      %s168 = sphi 0, %s167
      %s182 = sphi 0, %s168
      %s186 = sphi 0, %s186
      %s188 = sphi 0, %s186
      %s189 = sphi 0, %s188
      %s203 = sphi 0, %s189
      %s207 = sphi 0, %s207
      %s209 = sphi 0, %s207
      %s210 = sphi 0, %s209
      %s224 = sphi 0, %s210
      %s228 = sphi 0, %s228
      %s230 = sphi 0, %s228
      %s231 = sphi 0, %s230
      %s245 = sphi 0, %s231
      %s251 = sphi 0, %s253
      %s254 = sphi 0, %s251
      %s255 = sphi 0, %s254
      %s271 = sphi 0, %s255
      %s277 = sphi 0, %s279
      %s280 = sphi 0, %s277
      %s281 = sphi 0, %s280
      %s297 = sphi 0, %s281
    $region4: #{vae_forward.1} parent=1 // loop_header_branch
      %24 = sbr.rel (%p22) target = $region8
    $region5: #{vae_forward.1} parent=1 // loop_body
      %s26 = ssub.s32 %s21, 1
      %s27 = ssub.s32 %s21, 2
      %s28 = sadd.s32 %s21, 1
      %s29 = ssub.s32 %s21, %s28
      %p30 = scmp.eq.s32.totalorder %s29, 0
      %s32 = sadd.s32 %s31, 1
      %s33 = scalar_select %p30, %s31, %s32
      %p36 = pneg %p30
      %p37 = scmp.eq.s32.totalorder %s21, 1
      %p38 = por %p36, %p37
      %p39 = scmp.ne.s32.totalorder %s31, %s34
      %p40 = scmp.eq.s32.totalorder %s21, 0
      %p41 = por %p39, %p40
      %p42 = scmp.ne.s32.totalorder %s31, %s34
      %p43 = scmp.eq.s32.totalorder %s26, 1
      %p44 = por %p42, %p43
      %p45 = scmp.ne.s32.totalorder %s34, %s35
      %p46 = scmp.eq.s32.totalorder %s26, 0
      %p47 = por %p45, %p46
      %p48 = scmp.ne.s32.totalorder %s34, %s35
      %p49 = scmp.eq.s32.totalorder %s27, 1
      %p50 = por %p48, %p49
      %p52 = scmp.ne.s32.totalorder %s35, %s51
      %p53 = scmp.eq.s32.totalorder %s27, 0
      %p54 = por %p52, %p53
      %s55 = ssub.s32 %s21, %s28
      %p56 = scmp.eq.s32.totalorder %s55, 0
      %s58 = sadd.s32 %s57, 1
      %s59 = scalar_select %p56, %s57, %s58
      %p62 = pneg %p56
      %p63 = scmp.eq.s32.totalorder %s21, 1
      %p64 = por %p62, %p63
      %p65 = scmp.ne.s32.totalorder %s57, %s60
      %p66 = scmp.eq.s32.totalorder %s21, 0
      %p67 = por %p65, %p66
      %p68 = scmp.ne.s32.totalorder %s57, %s60
      %p69 = scmp.eq.s32.totalorder %s26, 1
      %p70 = por %p68, %p69
      %p71 = scmp.ne.s32.totalorder %s60, %s61
      %p72 = scmp.eq.s32.totalorder %s26, 0
      %p73 = por %p71, %p72
      %p74 = scmp.ne.s32.totalorder %s60, %s61
      %p75 = scmp.eq.s32.totalorder %s27, 1
      %p76 = por %p74, %p75
      %p78 = scmp.ne.s32.totalorder %s61, %s77
      %p79 = scmp.eq.s32.totalorder %s27, 0
      %p80 = por %p78, %p79
      %s82 = sadd.s32 %s81, 1
      %p85 = scmp.eq.s32.totalorder %s21, 1
      %p86 = scmp.ne.s32.totalorder %s81, %s83
      %p87 = scmp.eq.s32.totalorder %s21, 0
      %p88 = por %p86, %p87
      %p89 = scmp.ne.s32.totalorder %s81, %s83
      %p90 = scmp.eq.s32.totalorder %s26, 1
      %p91 = por %p89, %p90
      %p92 = scmp.ne.s32.totalorder %s83, %s84
      %p93 = scmp.eq.s32.totalorder %s26, 0
      %p94 = por %p92, %p93
      %p95 = scmp.ne.s32.totalorder %s83, %s84
      %p96 = scmp.eq.s32.totalorder %s27, 1
      %p97 = por %p95, %p96
      %p99 = scmp.ne.s32.totalorder %s84, %s98
      %p100 = scmp.eq.s32.totalorder %s27, 0
      %p101 = por %p99, %p100
      %s103 = sadd.s32 %s102, 1
      %p106 = scmp.eq.s32.totalorder %s21, 1
      %p107 = scmp.ne.s32.totalorder %s102, %s104
      %p108 = scmp.eq.s32.totalorder %s21, 0
      %p109 = por %p107, %p108
      %p110 = scmp.ne.s32.totalorder %s102, %s104
      %p111 = scmp.eq.s32.totalorder %s26, 1
      %p112 = por %p110, %p111
      %p113 = scmp.ne.s32.totalorder %s104, %s105
      %p114 = scmp.eq.s32.totalorder %s26, 0
      %p115 = por %p113, %p114
      %p116 = scmp.ne.s32.totalorder %s104, %s105
      %p117 = scmp.eq.s32.totalorder %s27, 1
      %p118 = por %p116, %p117
      %p120 = scmp.ne.s32.totalorder %s105, %s119
      %p121 = scmp.eq.s32.totalorder %s27, 0
      %p122 = por %p120, %p121
      %s124 = sadd.s32 %s123, 1
      %p127 = scmp.eq.s32.totalorder %s21, 1
      %p128 = scmp.ne.s32.totalorder %s123, %s125
      %p129 = scmp.eq.s32.totalorder %s21, 0
      %p130 = por %p128, %p129
      %p131 = scmp.ne.s32.totalorder %s123, %s125
      %p132 = scmp.eq.s32.totalorder %s26, 1
      %p133 = por %p131, %p132
      %p134 = scmp.ne.s32.totalorder %s125, %s126
      %p135 = scmp.eq.s32.totalorder %s26, 0
      %p136 = por %p134, %p135
      %p137 = scmp.ne.s32.totalorder %s125, %s126
      %p138 = scmp.eq.s32.totalorder %s27, 1
      %p139 = por %p137, %p138
      %p141 = scmp.ne.s32.totalorder %s126, %s140
      %p142 = scmp.eq.s32.totalorder %s27, 0
      %p143 = por %p141, %p142
      %s145 = sadd.s32 %s144, 1
      %p148 = scmp.eq.s32.totalorder %s21, 1
      %p149 = scmp.ne.s32.totalorder %s144, %s146
      %p150 = scmp.eq.s32.totalorder %s21, 0
      %p151 = por %p149, %p150
      %p152 = scmp.ne.s32.totalorder %s144, %s146
      %p153 = scmp.eq.s32.totalorder %s26, 1
      %p154 = por %p152, %p153
      %p155 = scmp.ne.s32.totalorder %s146, %s147
      %p156 = scmp.eq.s32.totalorder %s26, 0
      %p157 = por %p155, %p156
      %p158 = scmp.ne.s32.totalorder %s146, %s147
      %p159 = scmp.eq.s32.totalorder %s27, 1
      %p160 = por %p158, %p159
      %p162 = scmp.ne.s32.totalorder %s147, %s161
      %p163 = scmp.eq.s32.totalorder %s27, 0
      %p164 = por %p162, %p163
      %s166 = sadd.s32 %s165, 1
      %p169 = scmp.eq.s32.totalorder %s21, 1
      %p170 = scmp.ne.s32.totalorder %s165, %s167
      %p171 = scmp.eq.s32.totalorder %s21, 0
      %p172 = por %p170, %p171
      %p173 = scmp.ne.s32.totalorder %s165, %s167
      %p174 = scmp.eq.s32.totalorder %s26, 1
      %p175 = por %p173, %p174
      %p176 = scmp.ne.s32.totalorder %s167, %s168
      %p177 = scmp.eq.s32.totalorder %s26, 0
      %p178 = por %p176, %p177
      %p179 = scmp.ne.s32.totalorder %s167, %s168
      %p180 = scmp.eq.s32.totalorder %s27, 1
      %p181 = por %p179, %p180
      %p183 = scmp.ne.s32.totalorder %s168, %s182
      %p184 = scmp.eq.s32.totalorder %s27, 0
      %p185 = por %p183, %p184
      %s187 = sadd.s32 %s186, 1
      %p190 = scmp.eq.s32.totalorder %s21, 1
      %p191 = scmp.ne.s32.totalorder %s186, %s188
      %p192 = scmp.eq.s32.totalorder %s21, 0
      %p193 = por %p191, %p192
      %p194 = scmp.ne.s32.totalorder %s186, %s188
      %p195 = scmp.eq.s32.totalorder %s26, 1
      %p196 = por %p194, %p195
      %p197 = scmp.ne.s32.totalorder %s188, %s189
      %p198 = scmp.eq.s32.totalorder %s26, 0
      %p199 = por %p197, %p198
      %p200 = scmp.ne.s32.totalorder %s188, %s189
      %p201 = scmp.eq.s32.totalorder %s27, 1
      %p202 = por %p200, %p201
      %p204 = scmp.ne.s32.totalorder %s189, %s203
      %p205 = scmp.eq.s32.totalorder %s27, 0
      %p206 = por %p204, %p205
      %s208 = sadd.s32 %s207, 1
      %p211 = scmp.eq.s32.totalorder %s21, 1
      %p212 = scmp.ne.s32.totalorder %s207, %s209
      %p213 = scmp.eq.s32.totalorder %s21, 0
      %p214 = por %p212, %p213
      %p215 = scmp.ne.s32.totalorder %s207, %s209
      %p216 = scmp.eq.s32.totalorder %s26, 1
      %p217 = por %p215, %p216
      %p218 = scmp.ne.s32.totalorder %s209, %s210
      %p219 = scmp.eq.s32.totalorder %s26, 0
      %p220 = por %p218, %p219
      %p221 = scmp.ne.s32.totalorder %s209, %s210
      %p222 = scmp.eq.s32.totalorder %s27, 1
      %p223 = por %p221, %p222
      %p225 = scmp.ne.s32.totalorder %s210, %s224
      %p226 = scmp.eq.s32.totalorder %s27, 0
      %p227 = por %p225, %p226
      %s229 = sadd.s32 %s228, 1
      %p232 = scmp.eq.s32.totalorder %s21, 1
      %p233 = scmp.ne.s32.totalorder %s228, %s230
      %p234 = scmp.eq.s32.totalorder %s21, 0
      %p235 = por %p233, %p234
      %p236 = scmp.ne.s32.totalorder %s228, %s230
      %p237 = scmp.eq.s32.totalorder %s26, 1
      %p238 = por %p236, %p237
      %p239 = scmp.ne.s32.totalorder %s230, %s231
      %p240 = scmp.eq.s32.totalorder %s26, 0
      %p241 = por %p239, %p240
      %p242 = scmp.ne.s32.totalorder %s230, %s231
      %p243 = scmp.eq.s32.totalorder %s27, 1
      %p244 = por %p242, %p243
      %p246 = scmp.ne.s32.totalorder %s231, %s245
      %p247 = scmp.eq.s32.totalorder %s27, 0
      %p248 = por %p246, %p247
      %s249 = ssub.s32 %s21, %s28
      %p250 = scmp.eq.s32.totalorder %s249, 0
      %s252 = sadd.s32 %s251, 1
      %s253 = scalar_select %p250, %s251, %s252
      %p256 = pneg %p250
      %p257 = scmp.eq.s32.totalorder %s21, 1
      %p258 = por %p256, %p257
      %p259 = scmp.ne.s32.totalorder %s251, %s254
      %p260 = scmp.eq.s32.totalorder %s21, 0
      %p261 = por %p259, %p260
      %p262 = scmp.ne.s32.totalorder %s251, %s254
      %p263 = scmp.eq.s32.totalorder %s26, 1
      %p264 = por %p262, %p263
      %p265 = scmp.ne.s32.totalorder %s254, %s255
      %p266 = scmp.eq.s32.totalorder %s26, 0
      %p267 = por %p265, %p266
      %p268 = scmp.ne.s32.totalorder %s254, %s255
      %p269 = scmp.eq.s32.totalorder %s27, 1
      %p270 = por %p268, %p269
      %p272 = scmp.ne.s32.totalorder %s255, %s271
      %p273 = scmp.eq.s32.totalorder %s27, 0
      %p274 = por %p272, %p273
      %s275 = ssub.s32 %s21, %s28
      %p276 = scmp.eq.s32.totalorder %s275, 0
      %s278 = sadd.s32 %s277, 1
      %s279 = scalar_select %p276, %s277, %s278
      %p282 = pneg %p276
      %p283 = scmp.eq.s32.totalorder %s21, 1
      %p284 = por %p282, %p283
      %p285 = scmp.ne.s32.totalorder %s277, %s280
      %p286 = scmp.eq.s32.totalorder %s21, 0
      %p287 = por %p285, %p286
      %p288 = scmp.ne.s32.totalorder %s277, %s280
      %p289 = scmp.eq.s32.totalorder %s26, 1
      %p290 = por %p288, %p289
      %p291 = scmp.ne.s32.totalorder %s280, %s281
      %p292 = scmp.eq.s32.totalorder %s26, 0
      %p293 = por %p291, %p292
      %p294 = scmp.ne.s32.totalorder %s280, %s281
      %p295 = scmp.eq.s32.totalorder %s27, 1
      %p296 = por %p294, %p295
      %p298 = scmp.ne.s32.totalorder %s281, %s297
      %p299 = scmp.eq.s32.totalorder %s27, 0
      %p300 = por %p298, %p299
      %p301 = scmp.le.s32.totalorder 1, %s21
      %p302 = scmp.lt.s32.totalorder %s21, 3
      %p303 = pnand %p301, %p302
      %p304 = pneg %p303
      // Predicated region
      $region9: #{vae_forward.1} parent=5 // pred_check
        _
      $region10: #{vae_forward.1} parent=5 // pred_check_branch
        %306 = sbr.rel (%p303) target = $region12
      $region11: #{vae_forward.1} parent=5 // pred_region
        %s307 = ssub.s32 %s21, 1
        // Predicated region
        $region13: #{vae_forward.1} parent=11 // pred_check
          %p308 = pneg %p94
        $region14: #{vae_forward.1} parent=11 // pred_check_branch
          %310 = sbr.rel (%p308) target = $region16
        $region15: #{vae_forward.1} parent=11 // pred_region
          _
        $region16: #{vae_forward.1} parent=11 // pred_fallthru
          _
        // Predicated region
        $region17: #{vae_forward.1} parent=11 // pred_check
          %p311 = pneg %p115
        $region18: #{vae_forward.1} parent=11 // pred_check_branch
          %313 = sbr.rel (%p311) target = $region20
        $region19: #{vae_forward.1} parent=11 // pred_region
          _
        $region20: #{vae_forward.1} parent=11 // pred_fallthru
          _
        // Predicated region
        $region21: #{vae_forward.1} parent=11 // pred_check
          %p314 = pneg %p136
        $region22: #{vae_forward.1} parent=11 // pred_check_branch
          %316 = sbr.rel (%p314) target = $region24
        $region23: #{vae_forward.1} parent=11 // pred_region
          _
        $region24: #{vae_forward.1} parent=11 // pred_fallthru
          _
        // Predicated region
        $region25: #{vae_forward.1} parent=11 // pred_check
          %p317 = pneg %p157
        $region26: #{vae_forward.1} parent=11 // pred_check_branch
          %319 = sbr.rel (%p317) target = $region28
        $region27: #{vae_forward.1} parent=11 // pred_region
          _
        $region28: #{vae_forward.1} parent=11 // pred_fallthru
          _
        // Predicated region
        $region29: #{vae_forward.1} parent=11 // pred_check
          %p320 = pneg %p178
        $region30: #{vae_forward.1} parent=11 // pred_check_branch
          %322 = sbr.rel (%p320) target = $region32
        $region31: #{vae_forward.1} parent=11 // pred_region
          _
        $region32: #{vae_forward.1} parent=11 // pred_fallthru
          _
        // Predicated region
        $region33: #{vae_forward.1} parent=11 // pred_check
          %p323 = pneg %p199
        $region34: #{vae_forward.1} parent=11 // pred_check_branch
          %325 = sbr.rel (%p323) target = $region36
        $region35: #{vae_forward.1} parent=11 // pred_region
          _
        $region36: #{vae_forward.1} parent=11 // pred_fallthru
          _
        // Predicated region
        $region37: #{vae_forward.1} parent=11 // pred_check
          %p326 = pneg %p220
        $region38: #{vae_forward.1} parent=11 // pred_check_branch
          %328 = sbr.rel (%p326) target = $region40
        $region39: #{vae_forward.1} parent=11 // pred_region
          _
        $region40: #{vae_forward.1} parent=11 // pred_fallthru
          _
        // Predicated region
        $region41: #{vae_forward.1} parent=11 // pred_check
          %p329 = pneg %p241
        $region42: #{vae_forward.1} parent=11 // pred_check_branch
          %331 = sbr.rel (%p329) target = $region44
        $region43: #{vae_forward.1} parent=11 // pred_region
          _
        $region44: #{vae_forward.1} parent=11 // pred_fallthru
          _
      $region12: #{vae_forward.1} parent=5 // pred_fallthru
        _
      %p332 = scmp.lt.s32.totalorder %s21, 2
      // Predicated region
      $region45: #{vae_forward.1} parent=5 // pred_check
        %p333 = pneg %p332
      $region46: #{vae_forward.1} parent=5 // pred_check_branch
        %335 = sbr.rel (%p333) target = $region48
      $region47: #{vae_forward.1} parent=5 // pred_region
        // Predicated region
        $region49: #{vae_forward.1} parent=47 // pred_check
          %p336 = pneg %p41
        $region50: #{vae_forward.1} parent=47 // pred_check_branch
          %338 = sbr.rel (%p336) target = $region52
        $region51: #{vae_forward.1} parent=47 // pred_region
          %p339 = scmp.lt.s32.totalorder %s21, 1
          %s340 = scalar_select %p339, %s21, 1
          %s341 = smul.addr %s340, 2
          %s342 = smul.addr %s341, 8
          %s343 = scalar_lea.vmem %s0, %s342
        $region52: #{vae_forward.1} parent=47 // pred_fallthru
          _
        // Predicated region
        $region53: #{vae_forward.1} parent=47 // pred_check
          %p344 = pneg %p67
        $region54: #{vae_forward.1} parent=47 // pred_check_branch
          %346 = sbr.rel (%p344) target = $region56
        $region55: #{vae_forward.1} parent=47 // pred_region
          %p347 = scmp.lt.s32.totalorder %s21, 1
          %s348 = scalar_select %p347, %s21, 1
          %s349 = smul.addr %s348, 8
          %s350 = scalar_lea.vmem %s1, %s349
        $region56: #{vae_forward.1} parent=47 // pred_fallthru
          _
      $region48: #{vae_forward.1} parent=5 // pred_fallthru
        _
      %p351 = scmp.le.s32.totalorder 1, %s21
      %p352 = scmp.lt.s32.totalorder %s21, 3
      %p353 = pnand %p351, %p352
      %p354 = pneg %p353
      // Predicated region
      $region57: #{vae_forward.1} parent=5 // pred_check
        _
      $region58: #{vae_forward.1} parent=5 // pred_check_branch
        %356 = sbr.rel (%p353) target = $region60
      $region59: #{vae_forward.1} parent=5 // pred_region
        %s357 = ssub.s32 %s21, 1
        %p358 = scmp.lt.s32.totalorder %s26, 1
        %s359 = scalar_select %p358, %s26, 1
        %s360 = smul.addr %s359, 2
        %s361 = smul.addr %s360, 8
        %s362 = scalar_lea.vmem %s0, %s361
        %p363 = pneg %p47
        %p364 = pneg %p44
        %p365 = scmp.lt.s32.totalorder %s26, 1
        %s366 = scalar_select %p365, %s26, 1
        %s367 = smul.addr %s366, 8
        %s368 = scalar_lea.vmem %s1, %s367
        %p369 = pneg %p73
        %p370 = pneg %p70
        %p371 = pneg %p94
        %p372 = pneg %p91
        %p373 = pneg %p115
        %p374 = pneg %p112
        %p375 = pneg %p136
        %p376 = pneg %p133
        %p377 = pneg %p157
        %p378 = pneg %p154
        %p379 = pneg %p178
        %p380 = pneg %p175
        %p381 = pneg %p199
        %p382 = pneg %p196
        %p383 = pneg %p220
        %p384 = pneg %p217
        %p385 = pneg %p241
        %p386 = pneg %p238
        %p387 = pneg %p267
        %p388 = pneg %p264
        %s389 = sand.u32 %s254, 1
        %s390 = scalar_lea.sflag [#allocation3], %s389
        %s391 = sand.u32 %s254, 1
        %s392 = smul.addr %s391, 8
        %s393 = scalar_lea.vmem [#allocation2], %s392
        %p394 = pneg %p293
        %p395 = pneg %p290
        %p396 = scmp.lt.s32.totalorder %s26, 1
        %s397 = scalar_select %p396, %s26, 1
        %s398 = smul.addr %s397, 8
        %s399 = scalar_lea.vmem %s11, %s398
        %p400 = scmp.lt.s32.totalorder %s26, 1
        %s401 = scalar_select %p400, %s26, 1
        %s402 = smul.addr %s401, 2
        %s403 = smul.addr %s402, 8
        %s404 = scalar_lea.vmem %s0, %s403
        %p405 = scmp.lt.s32.totalorder %s26, 1
        %s406 = scalar_select %p405, %s26, 1
        %s407 = smul.addr %s406, 8
        %s408 = scalar_lea.vmem %s1, %s407
        %p409 = scmp.lt.s32.totalorder %s26, 1
        %s410 = scalar_select %p409, %s26, 1
        %s411 = smul.addr %s410, 8
        %s412 = scalar_lea.vmem %s11, %s411
        %v414 = vld [vmem:[%s404] sm:$0xff]
        %v415 = vld [vmem:[%s404 + $0x8] sm:$0xff]
        %v416 = vld [vmem:[%s408] sm:$0xff]
        %v417 = vpack.c.bf16 %v414, %v414
        %v418 = vpack.c.bf16 %v415, %v415
        %v419 = vld [vmem:[%s2] sm:$0xf]
        %v420 = vld [vmem:[%s2 + $0x4] sm:$0xf]
        %v421 = vld [vmem:[%s2 + $0x8] sm:$0xf]
        %v422 = vld [vmem:[%s2 + $0xc] sm:$0xf]
        %v423 = vld [vmem:[%s2 + $0x10] sm:$0xf]
        %v424 = vld [vmem:[%s2 + $0x14] sm:$0xf]
        %v425 = vld [vmem:[%s2 + $0x18] sm:$0xf]
        %v426 = vld [vmem:[%s2 + $0x1c] sm:$0xf]
        %v427 = vld [vmem:[%s2 + $0x20] sm:$0xf]
        %v428 = vld [vmem:[%s2 + $0x24] sm:$0xf]
        %v429 = vld [vmem:[%s2 + $0x28] sm:$0xf]
        %v430 = vld [vmem:[%s2 + $0x2c] sm:$0xf]
        %v431 = vld [vmem:[%s2 + $0x30] sm:$0xf]
        %v432 = vld [vmem:[%s2 + $0x34] sm:$0xf]
        %v433 = vld [vmem:[%s2 + $0x38] sm:$0xf]
        %v434 = vld [vmem:[%s2 + $0x3c] sm:$0xf]
        %v435 = vld [vmem:[%s2 + $0x40] sm:$0xf]
        %v436 = vld [vmem:[%s2 + $0x44] sm:$0xf]
        %v437 = vld [vmem:[%s2 + $0x48] sm:$0xf]
        %v438 = vld [vmem:[%s2 + $0x4c] sm:$0xf]
        %v439 = vld [vmem:[%s2 + $0x50] sm:$0xf]
        %v440 = vld [vmem:[%s2 + $0x54] sm:$0xf]
        %v441 = vld [vmem:[%s2 + $0x58] sm:$0xf]
        %v442 = vld [vmem:[%s2 + $0x5c] sm:$0xf]
        %v443 = vld [vmem:[%s2 + $0x60] sm:$0xf]
        %v444 = vld [vmem:[%s2 + $0x64] sm:$0xf]
        %v445 = vld [vmem:[%s2 + $0x68] sm:$0xf]
        %v446 = vld [vmem:[%s2 + $0x6c] sm:$0xf]
        %v447 = vld [vmem:[%s2 + $0x70] sm:$0xf]
        %v448 = vld [vmem:[%s2 + $0x74] sm:$0xf]
        %v449 = vld [vmem:[%s2 + $0x78] sm:$0xf]
        %v450 = vld [vmem:[%s2 + $0x7c] sm:$0xf]
        %v451 = vld [vmem:[%s3] sm:$0x1]
        %v453 = vlaneseq
        %v454 = vshrl.u32 %v453, 7
        %v455 = vsub.s32 0, %v454
        %v456 = vrot.slane %v451, %v455
        %v490 = vunpack.c.l.b16 %v419
        %v491 = vunpack.c.l.b16 %v420
        %v492 = vunpack.c.l.b16 %v421
        %v493 = vunpack.c.l.b16 %v422
        %v494 = vunpack.c.l.b16 %v423
        %v495 = vunpack.c.l.b16 %v424
        %v496 = vunpack.c.l.b16 %v425
        %v497 = vunpack.c.l.b16 %v426
        %v498 = vunpack.c.l.b16 %v427
        %v499 = vunpack.c.l.b16 %v428
        %v500 = vunpack.c.l.b16 %v429
        %v501 = vunpack.c.l.b16 %v430
        %v502 = vunpack.c.l.b16 %v431
        %v503 = vunpack.c.l.b16 %v432
        %v504 = vunpack.c.l.b16 %v433
        %v505 = vunpack.c.l.b16 %v434
        %v506 = vunpack.c.l.b16 %v435
        %v507 = vunpack.c.l.b16 %v436
        %v508 = vunpack.c.l.b16 %v437
        %v509 = vunpack.c.l.b16 %v438
        %v510 = vunpack.c.l.b16 %v439
        %v511 = vunpack.c.l.b16 %v440
        %v512 = vunpack.c.l.b16 %v441
        %v513 = vunpack.c.l.b16 %v442
        %v514 = vunpack.c.l.b16 %v443
        %v515 = vunpack.c.l.b16 %v444
        %v516 = vunpack.c.l.b16 %v445
        %v517 = vunpack.c.l.b16 %v446
        %v518 = vunpack.c.l.b16 %v447
        %v519 = vunpack.c.l.b16 %v448
        %v520 = vunpack.c.l.b16 %v449
        %v521 = vunpack.c.l.b16 %v450
        %v522 = vpack.c.b16 %v491, %v490
        %v523 = vpack.c.b16 %v493, %v492
        %v524 = vpack.c.b16 %v495, %v494
        %v525 = vpack.c.b16 %v497, %v496
        %v526 = vpack.c.b16 %v499, %v498
        %v527 = vpack.c.b16 %v501, %v500
        %v528 = vpack.c.b16 %v503, %v502
        %v529 = vpack.c.b16 %v505, %v504
        %v530 = vpack.c.b16 %v507, %v506
        %v531 = vpack.c.b16 %v509, %v508
        %v532 = vpack.c.b16 %v511, %v510
        %v533 = vpack.c.b16 %v513, %v512
        %v534 = vpack.c.b16 %v515, %v514
        %v535 = vpack.c.b16 %v517, %v516
        %v536 = vpack.c.b16 %v519, %v518
        %v537 = vpack.c.b16 %v521, %v520
        %554 = vmatprep.subr.bf16.mxu0 0
        %555 = vmatpush1.bf16.msra.mxu0 %v529
        %556 = vmatprep.subr.bf16.mxu0 0
        %557 = vmatpush1.bf16.msra.mxu0 %v528
        %558 = vmatprep.subr.bf16.mxu0 0
        %559 = vmatpush1.bf16.msra.mxu0 %v527
        %560 = vmatprep.subr.bf16.mxu0 0
        %561 = vmatpush1.bf16.msra.mxu0 %v526
        %562 = vmatprep.subr.bf16.mxu0 0
        %563 = vmatpush1.bf16.msra.mxu0 %v525
        %564 = vmatprep.subr.bf16.mxu0 0
        %565 = vmatpush1.bf16.msra.mxu0 %v524
        %566 = vmatprep.subr.bf16.mxu0 0
        %567 = vmatpush1.bf16.msra.mxu0 %v523
        %568 = vmatprep.subr.bf16.mxu0 0
        %569 = vmatpush1.bf16.msra.mxu0 %v522
        %570 = vmatprep.subr.bf16.mxu0 0
        %571 = vmatpush2.bf16.msra.mxu0 %v537
        %572 = vmatprep.subr.bf16.mxu0 0
        %573 = vmatpush2.bf16.msra.mxu0 %v536
        %574 = vmatprep.subr.bf16.mxu0 0
        %575 = vmatpush2.bf16.msra.mxu0 %v535
        %576 = vmatprep.subr.bf16.mxu0 0
        %577 = vmatpush2.bf16.msra.mxu0 %v534
        %578 = vmatprep.subr.bf16.mxu0 0
        %579 = vmatpush2.bf16.msra.mxu0 %v533
        %580 = vmatprep.subr.bf16.mxu0 0
        %581 = vmatpush2.bf16.msra.mxu0 %v532
        %582 = vmatprep.subr.bf16.mxu0 0
        %583 = vmatpush2.bf16.msra.mxu0 %v531
        %584 = vmatprep.subr.bf16.mxu0 0
        %585 = vmatpush2.bf16.msra.mxu0 %v530
        %586 = vmatprep.mubr.bf16.mxu0 %v418
        %587 = vmatmul.mubr.bf16.gmra.mxu0 %v417
        %v588 = vpop.f32.mrf.mxu0
        %v589 = vadd.f32 %v456, %v588
        %v590 = vpop.f32.mrf.mxu0
        %v591 = vpop.f32.mrf.mxu0
        %v592 = vpop.f32.mrf.mxu0
        %593 = vdwg.mxu0
        %v594 = vmax.f32 %v589, 0.0
        %v595 = vpack.c.bf16 %v594, %v594
        %v596 = vld [vmem:[%s4] sm:$0xf]
        %v597 = vld [vmem:[%s4 + $0x4] sm:$0xf]
        %v598 = vld [vmem:[%s4 + $0x8] sm:$0xf]
        %v599 = vld [vmem:[%s4 + $0xc] sm:$0xf]
        %v600 = vld [vmem:[%s5] sm:$0x1]
        %v602 = vlaneseq
        %v603 = vshrl.u32 %v602, 7
        %v604 = vsub.s32 0, %v603
        %v605 = vrot.slane %v600, %v604
        %v611 = vunpack.c.l.b16 %v596
        %v612 = vunpack.c.l.b16 %v597
        %v613 = vunpack.c.l.b16 %v598
        %v614 = vunpack.c.l.b16 %v599
        %v615 = vpack.c.b16 %v612, %v611
        %v616 = vpack.c.b16 %v614, %v613
        %vm619 = vcmask 261120
        %v621 = vsel %vm619, %v595, 0
        %623 = vmatprep.subr.bf16.mxu0 0
        %624 = vmatpush1.bf16.msra.mxu0 0
        %625 = vmatprep.subr.bf16.mxu0 0
        %626 = vmatpush1.bf16.msra.mxu0 0
        %627 = vmatprep.subr.bf16.mxu0 0
        %628 = vmatpush1.bf16.msra.mxu0 0
        %629 = vmatprep.subr.bf16.mxu0 0
        %630 = vmatpush1.bf16.msra.mxu0 0
        %631 = vmatprep.subr.bf16.mxu0 0
        %632 = vmatpush1.bf16.msra.mxu0 0
        %633 = vmatprep.subr.bf16.mxu0 0
        %634 = vmatpush1.bf16.msra.mxu0 0
        %635 = vmatprep.subr.bf16.mxu0 0
        %636 = vmatpush1.bf16.msra.mxu0 %v616
        %637 = vmatprep.subr.bf16.mxu0 0
        %638 = vmatpush1.bf16.msra.mxu0 %v615
        %639 = vmatprep.subr.bf16.mxu0 0
        %640 = vmatpush2.bf16.msra.mxu0 0
        %641 = vmatprep.subr.bf16.mxu0 0
        %642 = vmatpush2.bf16.msra.mxu0 0
        %643 = vmatprep.subr.bf16.mxu0 0
        %644 = vmatpush2.bf16.msra.mxu0 0
        %645 = vmatprep.subr.bf16.mxu0 0
        %646 = vmatpush2.bf16.msra.mxu0 0
        %647 = vmatprep.subr.bf16.mxu0 0
        %648 = vmatpush2.bf16.msra.mxu0 0
        %649 = vmatprep.subr.bf16.mxu0 0
        %650 = vmatpush2.bf16.msra.mxu0 0
        %651 = vmatprep.subr.bf16.mxu0 0
        %652 = vmatpush2.bf16.msra.mxu0 0
        %653 = vmatprep.subr.bf16.mxu0 0
        %654 = vmatpush2.bf16.msra.mxu0 0
        %655 = vmatprep.mubr.bf16.mxu0 0
        %656 = vmatmul.mubr.bf16.gmra.mxu0 %v621
        %v657 = vpop.f32.mrf.mxu0
        %v658 = vadd.f32 %v605, %v657
        %v659 = vpop.f32.mrf.mxu0
        %v660 = vpop.f32.mrf.mxu0
        %v661 = vpop.f32.mrf.mxu0
        %662 = vdwg.mxu0
        %v663 = vmul.f32 %v658, 0.5
        %v664 = vmul.f32 %v663, 1.442695
        %v665 = vpow.pop %v664
        %667 = vrot.lane.b32.xlu0 %v665, 120
        %v668 = vpop.permute.xlu0 %667
        %v670 = vmul.f32 %v416, %v668
        %v671 = vadd.f32 %v670, %v658
        %v672 = vpack.c.bf16 %v671, %v671
        %v673 = vld [vmem:[%s6] sm:$0xf]
        %v674 = vld [vmem:[%s7] sm:$0x1]
        %v676 = vlaneseq
        %v677 = vshrl.u32 %v676, 7
        %v678 = vsub.s32 0, %v677
        %v679 = vrot.slane %v674, %v678
        %vm681 = vcmask 64512
        %v683 = vsel %vm681, %v672, 0
        %vm685 = vcmask 1043456
        %v687 = vsel %vm685, %v673, 0
        %689 = vmatprep.subr.bf16.mxu0 0
        %690 = vmatpush1.bf16.msra.mxu0 0
        %691 = vmatprep.subr.bf16.mxu0 0
        %692 = vmatpush1.bf16.msra.mxu0 0
        %693 = vmatprep.subr.bf16.mxu0 0
        %694 = vmatpush1.bf16.msra.mxu0 0
        %695 = vmatprep.subr.bf16.mxu0 0
        %696 = vmatpush1.bf16.msra.mxu0 0
        %697 = vmatprep.subr.bf16.mxu0 0
        %698 = vmatpush1.bf16.msra.mxu0 0
        %699 = vmatprep.subr.bf16.mxu0 0
        %700 = vmatpush1.bf16.msra.mxu0 0
        %701 = vmatprep.subr.bf16.mxu0 0
        %702 = vmatpush1.bf16.msra.mxu0 0
        %703 = vmatprep.subr.bf16.mxu0 0
        %704 = vmatpush1.bf16.msra.mxu0 %v687
        %705 = vmatprep.subr.bf16.mxu0 0
        %706 = vmatpush2.bf16.msra.mxu0 0
        %707 = vmatprep.subr.bf16.mxu0 0
        %708 = vmatpush2.bf16.msra.mxu0 0
        %709 = vmatprep.subr.bf16.mxu0 0
        %710 = vmatpush2.bf16.msra.mxu0 0
        %711 = vmatprep.subr.bf16.mxu0 0
        %712 = vmatpush2.bf16.msra.mxu0 0
        %713 = vmatprep.subr.bf16.mxu0 0
        %714 = vmatpush2.bf16.msra.mxu0 0
        %715 = vmatprep.subr.bf16.mxu0 0
        %716 = vmatpush2.bf16.msra.mxu0 0
        %717 = vmatprep.subr.bf16.mxu0 0
        %718 = vmatpush2.bf16.msra.mxu0 0
        %719 = vmatprep.subr.bf16.mxu0 0
        %720 = vmatpush2.bf16.msra.mxu0 0
        %721 = vmatprep.mubr.bf16.mxu0 0
        %722 = vmatmul.mubr.bf16.gmra.mxu0 %v683
        %v723 = vpop.f32.mrf.mxu0
        %v724 = vadd.f32 %v679, %v723
        %v725 = vpop.f32.mrf.mxu0
        %v726 = vpop.f32.mrf.mxu0
        %v727 = vpop.f32.mrf.mxu0
        %728 = vdwg.mxu0
        %v729 = vmax.f32 %v724, 0.0
        %v730 = vpack.c.bf16 %v729, %v729
        %v731 = vld [vmem:[%s8] sm:$0xff]
        %v732 = vld [vmem:[%s8 + $0x8] sm:$0xff]
        %v733 = vld [vmem:[%s8 + $0x10] sm:$0xff]
        %v734 = vld [vmem:[%s8 + $0x18] sm:$0xff]
        %v735 = vld [vmem:[%s9] sm:$0x3]
        %v737 = vlaneseq
        %v738 = vshrl.u32 %v737, 7
        %v739 = vsub.s32 0, %v738
        %v740 = vrot.slane %v735, %v739
        %v741 = vlaneseq
        %v742 = vshrl.u32 %v741, 7
        %v743 = vsub.s32 1, %v742
        %v744 = vrot.slane %v735, %v743
        %v751 = vunpack.c.l.b16 %v731
        %v752 = vunpack.c.h.b16 %v731
        %v753 = vunpack.c.l.b16 %v732
        %v754 = vunpack.c.h.b16 %v732
        %v755 = vunpack.c.l.b16 %v733
        %v756 = vunpack.c.h.b16 %v733
        %v757 = vunpack.c.l.b16 %v734
        %v758 = vunpack.c.h.b16 %v734
        %v759 = vpack.c.b16 %v753, %v751
        %v760 = vpack.c.b16 %v754, %v752
        %v761 = vpack.c.b16 %v757, %v755
        %v762 = vpack.c.b16 %v758, %v756
        %v768 = vsel %vm619, %v730, 0
        %770 = vmatprep.subr.bf16.mxu0 0
        %771 = vmatpush1.bf16.msra.mxu0 0
        %772 = vmatprep.subr.bf16.mxu0 0
        %773 = vmatpush1.bf16.msra.mxu0 0
        %774 = vmatprep.subr.bf16.mxu0 0
        %775 = vmatpush1.bf16.msra.mxu0 0
        %776 = vmatprep.subr.bf16.mxu0 0
        %777 = vmatpush1.bf16.msra.mxu0 0
        %778 = vmatprep.subr.bf16.mxu0 0
        %779 = vmatpush1.bf16.msra.mxu0 0
        %780 = vmatprep.subr.bf16.mxu0 0
        %781 = vmatpush1.bf16.msra.mxu0 0
        %782 = vmatprep.subr.bf16.mxu0 %v762
        %783 = vmatpush1.bf16.msra.mxu0 %v761
        %784 = vmatprep.subr.bf16.mxu0 %v760
        %785 = vmatpush1.bf16.msra.mxu0 %v759
        %786 = vmatprep.subr.bf16.mxu0 0
        %787 = vmatpush2.bf16.msra.mxu0 0
        %788 = vmatprep.subr.bf16.mxu0 0
        %789 = vmatpush2.bf16.msra.mxu0 0
        %790 = vmatprep.subr.bf16.mxu0 0
        %791 = vmatpush2.bf16.msra.mxu0 0
        %792 = vmatprep.subr.bf16.mxu0 0
        %793 = vmatpush2.bf16.msra.mxu0 0
        %794 = vmatprep.subr.bf16.mxu0 0
        %795 = vmatpush2.bf16.msra.mxu0 0
        %796 = vmatprep.subr.bf16.mxu0 0
        %797 = vmatpush2.bf16.msra.mxu0 0
        %798 = vmatprep.subr.bf16.mxu0 0
        %799 = vmatpush2.bf16.msra.mxu0 0
        %800 = vmatprep.subr.bf16.mxu0 0
        %801 = vmatpush2.bf16.msra.mxu0 0
        %802 = vmatprep.mubr.bf16.mxu0 0
        %803 = vmatmul.mubr.bf16.gmra.mxu0 %v768
        %v804 = vpop.f32.mrf.mxu0
        %v805 = vadd.f32 %v740, %v804
        %v806 = vpop.f32.mrf.mxu0
        %v807 = vadd.f32 %v744, %v806
        %v808 = vpop.f32.mrf.mxu0
        %v809 = vpop.f32.mrf.mxu0
        %810 = vdwg.mxu0
        %v811 = vmul.f32 %v805, 0.5
        %v812 = vmul.f32 %v807, 0.5
        %v813 = vtanh.pop %v811
        %v814 = vtanh.pop %v812
        %v815 = vmul.f32 %v813, 0.5
        %v816 = vmul.f32 %v814, 0.5
        %v817 = vadd.f32 %v815, 0.5
        %v818 = vadd.f32 %v816, 0.5
        %v819 = vpack.c.bf16 %v817, %v817
        %v820 = vpack.c.bf16 %v818, %v818
        %v823 = vunpack.c.l.b16 %v819
        %v824 = vunpack.c.l.b16 %v820
        %v825 = vpack.c.b16 %v824, %v823
        %827 = vst [vmem:[%s393] sm:$0xff] %v825
        %vm828 = vcmask 130048
        %829 = vst.msk [vmem:[%s412] sm:$0xff] %vm828, %v658
        %s830 = sand.u32 %s254, 1
        %s831 = scalar_lea.sflag [#allocation3], %s830
        %s832 = sand.u32 %s254, 1
        %s833 = smul.addr %s832, 8
        %s834 = scalar_lea.vmem [#allocation2], %s833
        %p835 = scmp.lt.s32.totalorder %s26, 1
        %s836 = scalar_select %p835, %s26, 1
        %s837 = smul.addr %s836, 8
        %s838 = scalar_lea.vmem %s11, %s837
        // Predicated region
        $region61: #{vae_forward.1} parent=59 // pred_check
          %p839 = pneg %p264
        $region62: #{vae_forward.1} parent=59 // pred_check_branch
          %841 = sbr.rel (%p839) target = $region64
        $region63: #{vae_forward.1} parent=59 // pred_region
          %s843 = ssub.s32 128, 128
          %844 = vsyncadd %s831, %s843
          %s845 = smul.addr %s26, 2
          %s846 = smul.addr %s845, 64
          %s847 = scalar_lea.hbm %s10, %s846
          %s849 = sshll.u32 %s834, 4
          %s850 = int_to_ptr.vmem [resolvable:$true] %s849
          %852 = dma.vmem_to_hbm [thread:$0]  %s850, 128, %s847, %s831
        $region64: #{vae_forward.1} parent=59 // pred_fallthru
          _
        // Predicated region
        $region65: #{vae_forward.1} parent=59 // pred_check
          %p853 = pneg %p290
        $region66: #{vae_forward.1} parent=59 // pred_check_branch
          %855 = sbr.rel (%p853) target = $region68
        $region67: #{vae_forward.1} parent=59 // pred_region
          _
        $region68: #{vae_forward.1} parent=59 // pred_fallthru
          _
      $region60: #{vae_forward.1} parent=5 // pred_fallthru
        _
      %p856 = scmp.le.s32.totalorder 2, %s21
      // Predicated region
      $region69: #{vae_forward.1} parent=5 // pred_check
        %p857 = pneg %p856
      $region70: #{vae_forward.1} parent=5 // pred_check_branch
        %859 = sbr.rel (%p857) target = $region72
      $region71: #{vae_forward.1} parent=5 // pred_region
        %s860 = ssub.s32 %s21, 2
        // Predicated region
        $region73: #{vae_forward.1} parent=71 // pred_check
          %p861 = pneg %p270
        $region74: #{vae_forward.1} parent=71 // pred_check_branch
          %863 = sbr.rel (%p861) target = $region76
        $region75: #{vae_forward.1} parent=71 // pred_region
          %s864 = sand.u32 %s255, 1
          %s865 = scalar_lea.sflag [#allocation3], %s864
          %s866 = sand.u32 %s255, 1
          %s867 = smul.addr %s866, 8
          %s868 = scalar_lea.vmem [#allocation2], %s867
          %869 = dma.done %s865, 128
        $region76: #{vae_forward.1} parent=71 // pred_fallthru
          _
        // Predicated region
        $region77: #{vae_forward.1} parent=71 // pred_check
          %p870 = pneg %p296
        $region78: #{vae_forward.1} parent=71 // pred_check_branch
          %872 = sbr.rel (%p870) target = $region80
        $region79: #{vae_forward.1} parent=71 // pred_region
          %p873 = scmp.lt.s32.totalorder %s27, 1
          %s874 = scalar_select %p873, %s27, 1
          %s875 = smul.addr %s874, 8
          %s876 = scalar_lea.vmem %s11, %s875
        $region80: #{vae_forward.1} parent=71 // pred_fallthru
          _
      $region72: #{vae_forward.1} parent=5 // pred_fallthru
        _
    $region6: #{vae_forward.1} parent=1 // loop_footer
      %s25 = sadd.s32 1, %s21
    $region7: #{vae_forward.1} parent=1 // loop_footer_branch
      %20 = sbr.rel target = $region3
    $region8: #{vae_forward.1} parent=1 // loop_exit
      _
    %877 = vsyncpa [#allocation3], 1
    %s878 = scalar_lea.sflag [#allocation3], 1
    %879 = vsyncpa %s878, 1

</llo_original>
